<compile_context>
chip_gen: v7x
topology: tpu7x:2x2x1
jax: 0.10.0
libtpu: 0.0.40
codegen_flags: <defaults>
</compile_context>

<pallas_src>
import math

import jax
import jax.numpy as jnp
from jax.experimental import pallas as pl
from jax.experimental.pallas import tpu as pltpu

_HALF_LOG_2PI = 0.5 * math.log(2.0 * math.pi)


def _policy_kernel(x_ref, w1t_ref, b1t_ref, whead_ref, bhead_ref, out_ref):
    # Fused input slab: rows 0-8 state^T, rows 9-10 eps^T, rows 11-15 zero.
    x = x_ref[...]                                               # (16, TB)

    # fc1 + ReLU:  (128, 16) @ (16, TB) -> (128, TB)
    # (w1^T columns 9..15 are zero, so the eps rows do not contribute.)
    h = jnp.dot(w1t_ref[...], x,
                preferred_element_type=jnp.float32) + b1t_ref[...]
    h = jnp.maximum(h, 0.0)

    # Fused mu/std heads: (4, 128) @ (128, TB) -> (4, TB)
    heads = jnp.dot(whead_ref[...], h,
                    preferred_element_type=jnp.float32) + bhead_ref[...]
    mu = heads[0:2, :]                                           # (2, TB)
    std_pre = heads[2:4, :]                                      # (2, TB)

    # softplus (numerically stable, matches F.softplus threshold=20)
    std = jnp.where(std_pre > 20.0,
                    std_pre,
                    jnp.log1p(jnp.exp(jnp.minimum(std_pre, 20.0))))

    # Normal(mu, std).rsample() with externally supplied eps.
    eps = x[9:11, :]                                             # (2, TB)
    action = mu + std * eps

    # tanh squash.
    t = jnp.tanh(action)

    # Normal log_prob with (action - mu)/std == eps, tanh log-det correction,
    # and the two logs fused into one EUP push:
    #   -0.5*eps^2 - log(std) - 0.5*log(2*pi) - log(1 - t^2 + 1e-7)
    real_log_prob = (-0.5 * jnp.square(eps) - _HALF_LOG_2PI
                     - jnp.log(std * (1.0 - t * t + 1e-7)))

    # Direct lane-dense sub-slice stores (no sublane concat relayout).
    out_ref[0:2, :] = t
    out_ref[2:4, :] = real_log_prob


def _round_up(n, m):
    return ((n + m - 1) // m) * m


def _choose_tile(batch, tb):
    """Largest multiple-of-128 lane tile <= tb that keeps grid >= 2 (so the
    two v7x TensorCores both get work), never below 128."""
    b128 = _round_up(batch, 128)
    if b128 <= 128:
        return 128
    half = _round_up((b128 + 1) // 2, 128)
    return max(128, min(tb, half))


def policy_forward(state, params, eps_t, *, tb=8192):
    """state: (B, 9) f32; eps_t: (2, B) f32 (rsample noise, batch on lanes);
    params: kernel-layout dict from prepare_params()."""
    B = state.shape[0]
    TB = _choose_tile(B, tb)
    Bp = _round_up(_round_up(B, 128), TB)
    grid = (Bp // TB,)

    # Single fused input slab: state^T in rows 0-8, eps^T in rows 9-10,
    # zero K-pad in rows 11-15.  Zero columns B..Bp stay finite downstream
    # (std = softplus(bias term) > 0) and are sliced off at the end.
    xT = (jnp.zeros((16, Bp), jnp.float32)
          .at[0:9, :B].set(state.T)
          .at[9:11, :B].set(eps_t))

    # Only bump the scoped-VMEM limit when a very large tile needs it
    # (v5e default scoped VMEM is 16 MiB).
    vmem_est = (2 * (16 + 4) + 128) * TB * 4 + 64 * 1024
    cp_kwargs = dict(dimension_semantics=("parallel",))
    if vmem_est > 12 * 1024 * 1024:
        cp_kwargs["vmem_limit_bytes"] = min(int(2 * vmem_est), 64 * 1024 * 1024)

    out = pl.pallas_call(
        _policy_kernel,
        out_shape=jax.ShapeDtypeStruct((4, Bp), jnp.float32),
        grid_spec=pltpu.PrefetchScalarGridSpec(
            num_scalar_prefetch=0,
            grid=grid,
            in_specs=[
                pl.BlockSpec((16, TB), lambda i: (0, i)),    # state^T + eps^T tile
                pl.BlockSpec((128, 16), lambda i: (0, 0)),   # W1^T (VMEM-resident)
                pl.BlockSpec((128, 1), lambda i: (0, 0)),    # b1 column
                pl.BlockSpec((4, 128), lambda i: (0, 0)),    # fused head W
                pl.BlockSpec((4, 1), lambda i: (0, 0)),      # fused head b
            ],
            out_specs=pl.BlockSpec((4, TB), lambda i: (0, i)),
        ),
        compiler_params=pltpu.CompilerParams(**cp_kwargs),
    )(xT, params["w1t"], params["b1t"], params["whead"], params["bhead"])

    real_action = out[0:2, :B].T          # (B, 2)
    real_log_prob = out[2:4, :B].T        # (B, 2)
    return real_action, real_log_prob


def init_params(key):
    """PyTorch-style (uniform +-1/sqrt(fan_in)) init, conventional (in, out) layout."""
    ks = jax.random.split(key, 6)

    def linear(kw, kb, fan_in, fan_out):
        bound = 1.0 / math.sqrt(fan_in)
        w = jax.random.uniform(kw, (fan_in, fan_out), jnp.float32, -bound, bound)
        b = jax.random.uniform(kb, (1, fan_out), jnp.float32, -bound, bound)
        return w, b

    w1, b1 = linear(ks[0], ks[1], 9, 128)
    wmu, bmu = linear(ks[2], ks[3], 128, 2)
    wstd, bstd = linear(ks[4], ks[5], 128, 2)
    return {"w1": w1, "b1": b1, "wmu": wmu, "bmu": bmu,
            "wstd": wstd, "bstd": bstd}


def prepare_params(p):
    """Convert (in, out)-layout params into the kernel's transposed/fused layout.
    Columns 9..15 of w1t MUST stay zero: the eps noise rides in those rows of
    the fused input slab."""
    w1t = jnp.zeros((128, 16), jnp.float32).at[:, :9].set(p["w1"].T)
    b1t = p["b1"].reshape(128, 1)
    whead = jnp.concatenate([p["wmu"].T, p["wstd"].T], axis=0)          # (4, 128)
    bhead = jnp.concatenate([p["bmu"], p["bstd"]], axis=1).reshape(4, 1)
    return {"w1t": w1t, "b1t": b1t, "whead": whead, "bhead": bhead}


def _reference_forward(state, params, eps):
    """Pure-JAX reference, mirroring the PyTorch forward (eps: (B, 2))."""
    h = jax.nn.relu(state @ params["w1"] + params["b1"])
    mu = h @ params["wmu"] + params["bmu"]
    std = jax.nn.softplus(h @ params["wstd"] + params["bstd"])
    action = mu + std * eps
    log_prob = (-0.5 * jnp.square((action - mu) / std)
                - jnp.log(std) - _HALF_LOG_2PI)
    t = jnp.tanh(action)
    return t, log_prob - jnp.log(1.0 - t * t + 1e-7)


if __name__ == "__main__":
    key = jax.random.PRNGKey(0)
    k_param, k_state, k_eps, k_state2, k_eps2 = jax.random.split(key, 5)

    params = init_params(k_param)
    kparams = prepare_params(params)

    fwd = jax.jit(policy_forward, static_argnames=("tb",))

    # Small-batch check (single 128-lane tile).
    B = 8
    state = jax.random.normal(k_state, (B, 9), jnp.float32)
    eps_t = jax.random.normal(k_eps, (2, B), jnp.float32)   # rsample noise (lanes=batch)
    real_action, real_log_prob = fwd(state, kparams, eps_t)
    jax.block_until_ready((real_action, real_log_prob))
    ref_action, ref_log_prob = _reference_forward(state, params, eps_t.T)
    assert jnp.allclose(real_action, ref_action, atol=1e-5, rtol=1e-5)
    assert jnp.allclose(real_log_prob, ref_log_prob, atol=1e-4, rtol=1e-4)

    # Multi-tile + padding check: B=300 -> TB=256, Bp=512, grid=2 (both v7x TCs).
    B2 = 300
    state2 = jax.random.normal(k_state2, (B2, 9), jnp.float32)
    eps2_t = jax.random.normal(k_eps2, (2, B2), jnp.float32)
    a2, lp2 = fwd(state2, kparams, eps2_t)
    jax.block_until_ready((a2, lp2))
    ra2, rlp2 = _reference_forward(state2, params, eps2_t.T)
    assert jnp.allclose(a2, ra2, atol=1e-5, rtol=1e-5)
    assert jnp.allclose(lp2, rlp2, atol=1e-4, rtol=1e-4)

    print("KERNEL_OK")
</pallas_src>

<mosaic_0001>
module attributes {stable_mosaic.version = 11 : i64} {
  func.func @_policy_kernel(%arg0: i32, %arg1: memref<16x128xf32, #tpu.memory_space<vmem>>, %arg2: memref<128x16xf32, #tpu.memory_space<vmem>>, %arg3: memref<128x1xf32, #tpu.memory_space<vmem>>, %arg4: memref<4x128xf32, #tpu.memory_space<vmem>>, %arg5: memref<4x1xf32, #tpu.memory_space<vmem>>, %arg6: memref<4x128xf32, #tpu.memory_space<vmem>>) attributes {dimension_semantics = [#tpu.dimension_semantics<parallel>], iteration_bounds = array<i64: 1>, scalar_prefetch = 0 : i64, scratch_operands = 0 : i64, tpu.core_type = #tpu.core_type<tc>, window_params = [{transform_indices = @transform_0, window_bounds = array<i64: 16, 128>}, {pipeline_mode = #tpu.pipeline_mode<synchronous>, transform_indices = @transform_1, window_bounds = array<i64: 128, 16>}, {pipeline_mode = #tpu.pipeline_mode<synchronous>, transform_indices = @transform_2, window_bounds = array<i64: 128, 1>}, {pipeline_mode = #tpu.pipeline_mode<synchronous>, transform_indices = @transform_3, window_bounds = array<i64: 4, 128>}, {pipeline_mode = #tpu.pipeline_mode<synchronous>, transform_indices = @transform_4, window_bounds = array<i64: 4, 1>}, {transform_indices = @transform_5, window_bounds = array<i64: 4, 128>}]} {
    %c0 = arith.constant 0 : index
    %c0_0 = arith.constant 0 : index
    %0 = vector.load %arg1[%c0, %c0_0] : memref<16x128xf32, #tpu.memory_space<vmem>>, vector<16x128xf32>
    %c0_1 = arith.constant 0 : index
    %c0_2 = arith.constant 0 : index
    %1 = vector.load %arg2[%c0_1, %c0_2] : memref<128x16xf32, #tpu.memory_space<vmem>>, vector<128x16xf32>
    %cst = arith.constant dense<0.000000e+00> : vector<128x128xf32>
    %2 = tpu.matmul %1, %0, %cst {dimension_numbers = #tpu.dot_dimension_numbers<[1], [0], [0], [1], [0, 0, 1, 1], [], []>} : vector<128x16xf32>, vector<16x128xf32>, vector<128x128xf32> -> vector<128x128xf32>
    %c0_3 = arith.constant 0 : index
    %c0_4 = arith.constant 0 : index
    %3 = vector.load %arg3[%c0_3, %c0_4] : memref<128x1xf32, #tpu.memory_space<vmem>>, vector<128x1xf32>
    %4 = vector.broadcast %3 : vector<128x1xf32> to vector<128x128xf32>
    %5 = arith.addf %2, %4 : vector<128x128xf32>
    %cst_5 = arith.constant 0.000000e+00 : f32
    %6 = vector.broadcast %cst_5 : f32 to vector<128x128xf32>
    %7 = arith.maximumf %5, %6 : vector<128x128xf32>
    %c0_6 = arith.constant 0 : index
    %c0_7 = arith.constant 0 : index
    %8 = vector.load %arg4[%c0_6, %c0_7] : memref<4x128xf32, #tpu.memory_space<vmem>>, vector<4x128xf32>
    %cst_8 = arith.constant dense<0.000000e+00> : vector<4x128xf32>
    %9 = tpu.matmul %8, %7, %cst_8 {dimension_numbers = #tpu.dot_dimension_numbers<[1], [0], [0], [1], [0, 0, 1, 1], [], []>} : vector<4x128xf32>, vector<128x128xf32>, vector<4x128xf32> -> vector<4x128xf32>
    %c0_9 = arith.constant 0 : index
    %c0_10 = arith.constant 0 : index
    %10 = vector.load %arg5[%c0_9, %c0_10] : memref<4x1xf32, #tpu.memory_space<vmem>>, vector<4x1xf32>
    %11 = vector.broadcast %10 : vector<4x1xf32> to vector<4x128xf32>
    %12 = arith.addf %9, %11 : vector<4x128xf32>
    %13 = vector.extract_strided_slice %12 {offsets = [0, 0], sizes = [2, 128], strides = [1, 1]} : vector<4x128xf32> to vector<2x128xf32>
    %14 = vector.extract_strided_slice %12 {offsets = [2, 0], sizes = [2, 128], strides = [1, 1]} : vector<4x128xf32> to vector<2x128xf32>
    %cst_11 = arith.constant 2.000000e+01 : f32
    %15 = vector.broadcast %cst_11 : f32 to vector<2x128xf32>
    %16 = arith.cmpf ogt, %14, %15 : vector<2x128xf32>
    %cst_12 = arith.constant 2.000000e+01 : f32
    %17 = vector.broadcast %cst_12 : f32 to vector<2x128xf32>
    %18 = arith.minimumf %14, %17 : vector<2x128xf32>
    %19 = math.exp %18 : vector<2x128xf32>
    %20 = math.log1p %19 : vector<2x128xf32>
    %21 = arith.select %16, %14, %20 : vector<2x128xi1>, vector<2x128xf32>
    %22 = vector.extract_strided_slice %0 {offsets = [9, 0], sizes = [2, 128], strides = [1, 1]} : vector<16x128xf32> to vector<2x128xf32>
    %23 = arith.mulf %21, %22 : vector<2x128xf32>
    %24 = arith.addf %13, %23 : vector<2x128xf32>
    %25 = math.tanh %24 : vector<2x128xf32>
    %26 = arith.mulf %22, %22 : vector<2x128xf32>
    %cst_13 = arith.constant -5.000000e-01 : f32
    %27 = vector.broadcast %cst_13 : f32 to vector<2x128xf32>
    %28 = arith.mulf %27, %26 : vector<2x128xf32>
    %cst_14 = arith.constant 0.918938517 : f32
    %29 = vector.broadcast %cst_14 : f32 to vector<2x128xf32>
    %30 = arith.subf %28, %29 : vector<2x128xf32>
    %31 = arith.mulf %25, %25 : vector<2x128xf32>
    %cst_15 = arith.constant 1.000000e+00 : f32
    %32 = vector.broadcast %cst_15 : f32 to vector<2x128xf32>
    %33 = arith.subf %32, %31 : vector<2x128xf32>
    %cst_16 = arith.constant 1.000000e-07 : f32
    %34 = vector.broadcast %cst_16 : f32 to vector<2x128xf32>
    %35 = arith.addf %33, %34 : vector<2x128xf32>
    %36 = arith.mulf %21, %35 : vector<2x128xf32>
    %37 = math.log %36 : vector<2x128xf32>
    %38 = arith.subf %30, %37 : vector<2x128xf32>
    %c0_17 = arith.constant 0 : index
    %c0_18 = arith.constant 0 : index
    %39 = vector.load %arg6[%c0_17, %c0_18] : memref<4x128xf32, #tpu.memory_space<vmem>>, vector<2x128xf32>
    tpu.vector_store %arg6[%c0_17, %c0_18], %25 {strides = array<i32>} : memref<4x128xf32, #tpu.memory_space<vmem>>, vector<2x128xf32>,
    %c2 = arith.constant 2 : index
    %c0_19 = arith.constant 0 : index
    %40 = vector.load %arg6[%c2, %c0_19] : memref<4x128xf32, #tpu.memory_space<vmem>>, vector<2x128xf32>
    tpu.vector_store %arg6[%c2, %c0_19], %38 {strides = array<i32>} : memref<4x128xf32, #tpu.memory_space<vmem>>, vector<2x128xf32>,
    return
  }
  func.func @transform_0(%arg0: i32) -> (i32, i32) {
    %c0_i32 = arith.constant 0 : i32
    %c0_i32_0 = arith.constant 0 : i32
    return %c0_i32, %arg0 : i32, i32
  }
  func.func @transform_1(%arg0: i32) -> (i32, i32) {
    %c0_i32 = arith.constant 0 : i32
    %c0_i32_0 = arith.constant 0 : i32
    %c0_i32_1 = arith.constant 0 : i32
    return %c0_i32, %c0_i32_0 : i32, i32
  }
  func.func @transform_2(%arg0: i32) -> (i32, i32) {
    %c0_i32 = arith.constant 0 : i32
    %c0_i32_0 = arith.constant 0 : i32
    %c0_i32_1 = arith.constant 0 : i32
    return %c0_i32, %c0_i32_0 : i32, i32
  }
  func.func @transform_3(%arg0: i32) -> (i32, i32) {
    %c0_i32 = arith.constant 0 : i32
    %c0_i32_0 = arith.constant 0 : i32
    %c0_i32_1 = arith.constant 0 : i32
    return %c0_i32, %c0_i32_0 : i32, i32
  }
  func.func @transform_4(%arg0: i32) -> (i32, i32) {
    %c0_i32 = arith.constant 0 : i32
    %c0_i32_0 = arith.constant 0 : i32
    %c0_i32_1 = arith.constant 0 : i32
    return %c0_i32, %c0_i32_0 : i32, i32
  }
  func.func @transform_5(%arg0: i32) -> (i32, i32) {
    %c0_i32 = arith.constant 0 : i32
    %c0_i32_0 = arith.constant 0 : i32
    return %c0_i32, %arg0 : i32, i32
  }
}

</mosaic_0001>

<llo_original>
// kernel: policy_forward.1
$region0: #{policy_forward.1}
  #allocation0 [shape = 'u32[]', space=smem, size = 0x4, offset = 0x4, fixed_abs, tag = 'smem constant byte address 0x4 - core index']
  #allocation1 [shape = 'u32[144,128]{1,0:T(1,128)}', space=vmem, size = 0x12000, scoped, tag = 'internal scratch']
  %s0 = inlined_call_operand.vmem [shape: f32[16,128], index: 0, kind: input, shape index: {}]
  %s1 = inlined_call_operand.vmem [shape: f32[128,16], index: 1, kind: input, shape index: {}]
  %s2 = inlined_call_operand.vmem [shape: f32[128,1], index: 2, kind: input, shape index: {}]
  %s3 = inlined_call_operand.vmem [shape: f32[4,128], index: 3, kind: input, shape index: {}]
  %s4 = inlined_call_operand.vmem [shape: f32[4,1], index: 4, kind: input, shape index: {}]
  %s5 = inlined_call_operand.vmem [shape: f32[4,128], index: 5, kind: output, shape index: {}]
  %s6 = sld [smem:[#allocation0]]
  $region30: #{policy_forward.1} parent=0
    _
  %s8 = ssub.s32 1, %s6
  %s9 = scalar_select 0, %s8, %s6
  // Predicated region
  $region2: #{policy_forward.1} parent=0 // pred_check
    _
  $region3: #{policy_forward.1} parent=0 // pred_check_branch
    %11 = sbr.rel (0) target = $region5
  $region4: #{policy_forward.1} parent=0 // pred_region
    _
  $region5: #{policy_forward.1} parent=0 // pred_fallthru
    _
  // Predicated region
  $region6: #{policy_forward.1} parent=0 // pred_check
    _
  $region7: #{policy_forward.1} parent=0 // pred_check_branch
    %13 = sbr.rel (0) target = $region9
  $region8: #{policy_forward.1} parent=0 // pred_region
    _
  $region9: #{policy_forward.1} parent=0 // pred_fallthru
    _
  // Predicated region
  $region10: #{policy_forward.1} parent=0 // pred_check
    _
  $region11: #{policy_forward.1} parent=0 // pred_check_branch
    %15 = sbr.rel (0) target = $region13
  $region12: #{policy_forward.1} parent=0 // pred_region
    _
  $region13: #{policy_forward.1} parent=0 // pred_fallthru
    _
  // Predicated region
  $region14: #{policy_forward.1} parent=0 // pred_check
    _
  $region15: #{policy_forward.1} parent=0 // pred_check_branch
    %17 = sbr.rel (0) target = $region17
  $region16: #{policy_forward.1} parent=0 // pred_region
    _
  $region17: #{policy_forward.1} parent=0 // pred_fallthru
    _
  // Predicated region
  $region18: #{policy_forward.1} parent=0 // pred_check
    _
  $region19: #{policy_forward.1} parent=0 // pred_check_branch
    %19 = sbr.rel (0) target = $region21
  $region20: #{policy_forward.1} parent=0 // pred_region
    _
  $region21: #{policy_forward.1} parent=0 // pred_fallthru
    _
  %v20 = vld [vmem:[%s0] sm:$0xff]
  %v21 = vld [vmem:[%s0 + $0x8] sm:$0xff]
  %v22 = vld [vmem:[%s1] sm:$0xff]
  %v23 = vld [vmem:[%s1 + $0x8] sm:$0xff]
  %v24 = vld [vmem:[%s1 + $0x10] sm:$0xff]
  %v25 = vld [vmem:[%s1 + $0x18] sm:$0xff]
  %v26 = vld [vmem:[%s1 + $0x20] sm:$0xff]
  %v27 = vld [vmem:[%s1 + $0x28] sm:$0xff]
  %v28 = vld [vmem:[%s1 + $0x30] sm:$0xff]
  %v29 = vld [vmem:[%s1 + $0x38] sm:$0xff]
  %v30 = vld [vmem:[%s1 + $0x40] sm:$0xff]
  %v31 = vld [vmem:[%s1 + $0x48] sm:$0xff]
  %v32 = vld [vmem:[%s1 + $0x50] sm:$0xff]
  %v33 = vld [vmem:[%s1 + $0x58] sm:$0xff]
  %v34 = vld [vmem:[%s1 + $0x60] sm:$0xff]
  %v35 = vld [vmem:[%s1 + $0x68] sm:$0xff]
  %v36 = vld [vmem:[%s1 + $0x70] sm:$0xff]
  %v37 = vld [vmem:[%s1 + $0x78] sm:$0xff]
  %v38 = vld [vmem:[%s2] sm:$0xff]
  %v39 = vld [vmem:[%s2 + $0x8] sm:$0xff]
  %v40 = vld [vmem:[%s2 + $0x10] sm:$0xff]
  %v41 = vld [vmem:[%s2 + $0x18] sm:$0xff]
  %v42 = vld [vmem:[%s2 + $0x20] sm:$0xff]
  %v43 = vld [vmem:[%s2 + $0x28] sm:$0xff]
  %v44 = vld [vmem:[%s2 + $0x30] sm:$0xff]
  %v45 = vld [vmem:[%s2 + $0x38] sm:$0xff]
  %v46 = vld [vmem:[%s2 + $0x40] sm:$0xff]
  %v47 = vld [vmem:[%s2 + $0x48] sm:$0xff]
  %v48 = vld [vmem:[%s2 + $0x50] sm:$0xff]
  %v49 = vld [vmem:[%s2 + $0x58] sm:$0xff]
  %v50 = vld [vmem:[%s2 + $0x60] sm:$0xff]
  %v51 = vld [vmem:[%s2 + $0x68] sm:$0xff]
  %v52 = vld [vmem:[%s2 + $0x70] sm:$0xff]
  %v53 = vld [vmem:[%s2 + $0x78] sm:$0xff]
  %55 = vset.pattern.permute.xlu0 0
  %56 = vperm.xlu0 %55, %v38
  %v57 = vpop.permute.xlu0 %56
  %60 = vset.pattern.permute.xlu0 0
  %61 = vperm.xlu0 %60, %v39
  %v62 = vpop.permute.xlu0 %61
  %65 = vset.pattern.permute.xlu0 0
  %66 = vperm.xlu0 %65, %v40
  %v67 = vpop.permute.xlu0 %66
  %70 = vset.pattern.permute.xlu0 0
  %71 = vperm.xlu0 %70, %v41
  %v72 = vpop.permute.xlu0 %71
  %75 = vset.pattern.permute.xlu0 0
  %76 = vperm.xlu0 %75, %v42
  %v77 = vpop.permute.xlu0 %76
  %80 = vset.pattern.permute.xlu0 0
  %81 = vperm.xlu0 %80, %v43
  %v82 = vpop.permute.xlu0 %81
  %85 = vset.pattern.permute.xlu0 0
  %86 = vperm.xlu0 %85, %v44
  %v87 = vpop.permute.xlu0 %86
  %90 = vset.pattern.permute.xlu0 0
  %91 = vperm.xlu0 %90, %v45
  %v92 = vpop.permute.xlu0 %91
  %95 = vset.pattern.permute.xlu0 0
  %96 = vperm.xlu0 %95, %v46
  %v97 = vpop.permute.xlu0 %96
  %100 = vset.pattern.permute.xlu0 0
  %101 = vperm.xlu0 %100, %v47
  %v102 = vpop.permute.xlu0 %101
  %105 = vset.pattern.permute.xlu0 0
  %106 = vperm.xlu0 %105, %v48
  %v107 = vpop.permute.xlu0 %106
  %110 = vset.pattern.permute.xlu0 0
  %111 = vperm.xlu0 %110, %v49
  %v112 = vpop.permute.xlu0 %111
  %115 = vset.pattern.permute.xlu0 0
  %116 = vperm.xlu0 %115, %v50
  %v117 = vpop.permute.xlu0 %116
  %120 = vset.pattern.permute.xlu0 0
  %121 = vperm.xlu0 %120, %v51
  %v122 = vpop.permute.xlu0 %121
  %125 = vset.pattern.permute.xlu0 0
  %126 = vperm.xlu0 %125, %v52
  %v127 = vpop.permute.xlu0 %126
  %130 = vset.pattern.permute.xlu0 0
  %131 = vperm.xlu0 %130, %v53
  %v132 = vpop.permute.xlu0 %131
  %vm134 = vcmask 130048
  %v136 = vsel %vm134, %v22, 0
  %v139 = vsel %vm134, %v23, 0
  %v142 = vsel %vm134, %v24, 0
  %v145 = vsel %vm134, %v25, 0
  %v148 = vsel %vm134, %v26, 0
  %v151 = vsel %vm134, %v27, 0
  %v154 = vsel %vm134, %v28, 0
  %v157 = vsel %vm134, %v29, 0
  %v160 = vsel %vm134, %v30, 0
  %v163 = vsel %vm134, %v31, 0
  %v166 = vsel %vm134, %v32, 0
  %v169 = vsel %vm134, %v33, 0
  %v172 = vsel %vm134, %v34, 0
  %v175 = vsel %vm134, %v35, 0
  %v178 = vsel %vm134, %v36, 0
  %v181 = vsel %vm134, %v37, 0
  %183 = vmatprep.subr.mxu0 0.0
  %184 = vmatpush1.msra.mxu0 %v20
  %185 = vmatprep.subr.mxu0 0.0
  %186 = vmatpush1.msra.mxu0 %v21
  %187 = vmatprep.subr.mxu0 0.0
  %188 = vmatpush1.msra.mxu0 0.0
  %189 = vmatprep.subr.mxu0 0.0
  %190 = vmatpush1.msra.mxu0 0.0
  %191 = vmatprep.subr.mxu0 0.0
  %192 = vmatpush1.msra.mxu0 0.0
  %193 = vmatprep.subr.mxu0 0.0
  %194 = vmatpush1.msra.mxu0 0.0
  %195 = vmatprep.subr.mxu0 0.0
  %196 = vmatpush1.msra.mxu0 0.0
  %197 = vmatprep.subr.mxu0 0.0
  %198 = vmatpush1.msra.mxu0 0.0
  %199 = vmatprep.subr.mxu0 0.0
  %200 = vmatpush1.msra.mxu0 0.0
  %201 = vmatprep.subr.mxu0 0.0
  %202 = vmatpush1.msra.mxu0 0.0
  %203 = vmatprep.subr.mxu0 0.0
  %204 = vmatpush1.msra.mxu0 0.0
  %205 = vmatprep.subr.mxu0 0.0
  %206 = vmatpush1.msra.mxu0 0.0
  %207 = vmatprep.subr.mxu0 0.0
  %208 = vmatpush1.msra.mxu0 0.0
  %209 = vmatprep.subr.mxu0 0.0
  %210 = vmatpush1.msra.mxu0 0.0
  %211 = vmatprep.subr.mxu0 0.0
  %212 = vmatpush1.msra.mxu0 0.0
  %213 = vmatprep.subr.mxu0 0.0
  %214 = vmatpush1.msra.mxu0 0.0
  %215 = vmatprep.subr.mxu0 0.0
  %216 = vmatpush1.msra.mxu0 0.0
  %217 = vmatprep.subr.mxu0 0.0
  %218 = vmatpush1.msra.mxu0 0.0
  %219 = vmatprep.subr.mxu0 0.0
  %220 = vmatpush1.msra.mxu0 0.0
  %221 = vmatprep.subr.mxu0 0.0
  %222 = vmatpush1.msra.mxu0 0.0
  %223 = vmatprep.subr.mxu0 0.0
  %224 = vmatpush1.msra.mxu0 0.0
  %225 = vmatprep.subr.mxu0 0.0
  %226 = vmatpush1.msra.mxu0 0.0
  %227 = vmatprep.subr.mxu0 0.0
  %228 = vmatpush1.msra.mxu0 0.0
  %229 = vmatprep.subr.mxu0 0.0
  %230 = vmatpush1.msra.mxu0 0.0
  %231 = vmatprep.subr.mxu0 0.0
  %232 = vmatpush1.msra.mxu0 0.0
  %233 = vmatprep.subr.mxu0 0.0
  %234 = vmatpush1.msra.mxu0 0.0
  %235 = vmatprep.subr.mxu0 0.0
  %236 = vmatpush1.msra.mxu0 0.0
  %237 = vmatprep.subr.mxu0 0.0
  %238 = vmatpush1.msra.mxu0 0.0
  %239 = vmatprep.subr.mxu0 0.0
  %240 = vmatpush1.msra.mxu0 0.0
  %241 = vmatprep.subr.mxu0 0.0
  %242 = vmatpush1.msra.mxu0 0.0
  %243 = vmatprep.subr.mxu0 0.0
  %244 = vmatpush1.msra.mxu0 0.0
  %245 = vmatprep.subr.mxu0 0.0
  %246 = vmatpush1.msra.mxu0 0.0
  %247 = vmatprep.mubr.f32.mxu0 0.0
  %248 = vmatmul.mubr.f32.gmra.mrb[0].mxu0 %v136
  %v249 = vpop.f32.mrb[0].mxu0
  %v250 = vadd.f32 %v57, %v249
  %v251 = vpop.f32.mrb[0].mxu0
  %252 = vmatprep.mubr.f32.mxu0 0.0
  %253 = vmatmul.mubr.f32.gmra.mrb[0].mxu0 %v139
  %v254 = vpop.f32.mrb[0].mxu0
  %v255 = vadd.f32 %v62, %v254
  %v256 = vpop.f32.mrb[0].mxu0
  %257 = vmatprep.mubr.f32.mxu0 0.0
  %258 = vmatmul.mubr.f32.gmra.mrb[0].mxu0 %v142
  %v259 = vpop.f32.mrb[0].mxu0
  %v260 = vadd.f32 %v67, %v259
  %v261 = vpop.f32.mrb[0].mxu0
  %262 = vmatprep.mubr.f32.mxu0 0.0
  %263 = vmatmul.mubr.f32.gmra.mrb[0].mxu0 %v145
  %v264 = vpop.f32.mrb[0].mxu0
  %v265 = vadd.f32 %v72, %v264
  %v266 = vpop.f32.mrb[0].mxu0
  %267 = vmatprep.mubr.f32.mxu0 0.0
  %268 = vmatmul.mubr.f32.gmra.mrb[0].mxu0 %v148
  %v269 = vpop.f32.mrb[0].mxu0
  %v270 = vadd.f32 %v77, %v269
  %v271 = vpop.f32.mrb[0].mxu0
  %272 = vmatprep.mubr.f32.mxu0 0.0
  %273 = vmatmul.mubr.f32.gmra.mrb[0].mxu0 %v151
  %v274 = vpop.f32.mrb[0].mxu0
  %v275 = vadd.f32 %v82, %v274
  %v276 = vpop.f32.mrb[0].mxu0
  %277 = vmatprep.mubr.f32.mxu0 0.0
  %278 = vmatmul.mubr.f32.gmra.mrb[0].mxu0 %v154
  %v279 = vpop.f32.mrb[0].mxu0
  %v280 = vadd.f32 %v87, %v279
  %v281 = vpop.f32.mrb[0].mxu0
  %282 = vmatprep.mubr.f32.mxu0 0.0
  %283 = vmatmul.mubr.f32.gmra.mrb[0].mxu0 %v157
  %v284 = vpop.f32.mrb[0].mxu0
  %v285 = vadd.f32 %v92, %v284
  %v286 = vpop.f32.mrb[0].mxu0
  %287 = vmatprep.mubr.f32.mxu0 0.0
  %288 = vmatmul.mubr.f32.gmra.mrb[0].mxu0 %v160
  %v289 = vpop.f32.mrb[0].mxu0
  %v290 = vadd.f32 %v97, %v289
  %v291 = vpop.f32.mrb[0].mxu0
  %292 = vmatprep.mubr.f32.mxu0 0.0
  %293 = vmatmul.mubr.f32.gmra.mrb[0].mxu0 %v163
  %v294 = vpop.f32.mrb[0].mxu0
  %v295 = vadd.f32 %v102, %v294
  %v296 = vpop.f32.mrb[0].mxu0
  %297 = vmatprep.mubr.f32.mxu0 0.0
  %298 = vmatmul.mubr.f32.gmra.mrb[0].mxu0 %v166
  %v299 = vpop.f32.mrb[0].mxu0
  %v300 = vadd.f32 %v107, %v299
  %v301 = vpop.f32.mrb[0].mxu0
  %302 = vmatprep.mubr.f32.mxu0 0.0
  %303 = vmatmul.mubr.f32.gmra.mrb[0].mxu0 %v169
  %v304 = vpop.f32.mrb[0].mxu0
  %v305 = vadd.f32 %v112, %v304
  %v306 = vpop.f32.mrb[0].mxu0
  %307 = vmatprep.mubr.f32.mxu0 0.0
  %308 = vmatmul.mubr.f32.gmra.mrb[0].mxu0 %v172
  %v309 = vpop.f32.mrb[0].mxu0
  %v310 = vadd.f32 %v117, %v309
  %v311 = vpop.f32.mrb[0].mxu0
  %312 = vmatprep.mubr.f32.mxu0 0.0
  %313 = vmatmul.mubr.f32.gmra.mrb[0].mxu0 %v175
  %v314 = vpop.f32.mrb[0].mxu0
  %v315 = vadd.f32 %v122, %v314
  %v316 = vpop.f32.mrb[0].mxu0
  %317 = vmatprep.mubr.f32.mxu0 0.0
  %318 = vmatmul.mubr.f32.gmra.mrb[0].mxu0 %v178
  %v319 = vpop.f32.mrb[0].mxu0
  %v320 = vadd.f32 %v127, %v319
  %v321 = vpop.f32.mrb[0].mxu0
  %322 = vmatprep.mubr.f32.mxu0 0.0
  %323 = vmatmul.mubr.f32.gmra.mrb[0].mxu0 %v181
  %v324 = vpop.f32.mrb[0].mxu0
  %v325 = vadd.f32 %v132, %v324
  %v326 = vpop.f32.mrb[0].mxu0
  %327 = vdwg.mxu0
  %v328 = vmax.f32 %v250, 0.0
  %v329 = vmax.f32 %v255, 0.0
  %v330 = vmax.f32 %v260, 0.0
  %v331 = vmax.f32 %v265, 0.0
  %v332 = vmax.f32 %v270, 0.0
  %v333 = vmax.f32 %v275, 0.0
  %v334 = vmax.f32 %v280, 0.0
  %v335 = vmax.f32 %v285, 0.0
  %v336 = vmax.f32 %v290, 0.0
  %v337 = vmax.f32 %v295, 0.0
  %v338 = vmax.f32 %v300, 0.0
  %v339 = vmax.f32 %v305, 0.0
  %v340 = vmax.f32 %v310, 0.0
  %v341 = vmax.f32 %v315, 0.0
  %v342 = vmax.f32 %v320, 0.0
  %v343 = vmax.f32 %v325, 0.0
  %v344 = vld [vmem:[%s3] sm:$0xf]
  %v345 = vld [vmem:[%s4] sm:$0xf]
  %347 = vset.pattern.permute.xlu0 0
  %348 = vperm.xlu0 %347, %v345
  %v349 = vpop.permute.xlu0 %348
  %351 = vmatprep.subr.mxu0 0.0
  %352 = vmatpush1.msra.mxu0 %v328
  %353 = vmatprep.subr.mxu0 0.0
  %354 = vmatpush1.msra.mxu0 %v329
  %355 = vmatprep.subr.mxu0 0.0
  %356 = vmatpush1.msra.mxu0 %v330
  %357 = vmatprep.subr.mxu0 0.0
  %358 = vmatpush1.msra.mxu0 %v331
  %359 = vmatprep.subr.mxu0 0.0
  %360 = vmatpush1.msra.mxu0 %v332
  %361 = vmatprep.subr.mxu0 0.0
  %362 = vmatpush1.msra.mxu0 %v333
  %363 = vmatprep.subr.mxu0 0.0
  %364 = vmatpush1.msra.mxu0 %v334
  %365 = vmatprep.subr.mxu0 0.0
  %366 = vmatpush1.msra.mxu0 %v335
  %367 = vmatprep.subr.mxu0 0.0
  %368 = vmatpush1.msra.mxu0 %v336
  %369 = vmatprep.subr.mxu0 0.0
  %370 = vmatpush1.msra.mxu0 %v337
  %371 = vmatprep.subr.mxu0 0.0
  %372 = vmatpush1.msra.mxu0 %v338
  %373 = vmatprep.subr.mxu0 0.0
  %374 = vmatpush1.msra.mxu0 %v339
  %375 = vmatprep.subr.mxu0 0.0
  %376 = vmatpush1.msra.mxu0 %v340
  %377 = vmatprep.subr.mxu0 0.0
  %378 = vmatpush1.msra.mxu0 %v341
  %379 = vmatprep.subr.mxu0 0.0
  %380 = vmatpush1.msra.mxu0 %v342
  %381 = vmatprep.subr.mxu0 0.0
  %382 = vmatpush1.msra.mxu0 %v343
  %383 = vmatprep.subr.mxu0 0.0
  %384 = vmatpush1.msra.mxu0 0.0
  %385 = vmatprep.subr.mxu0 0.0
  %386 = vmatpush1.msra.mxu0 0.0
  %387 = vmatprep.subr.mxu0 0.0
  %388 = vmatpush1.msra.mxu0 0.0
  %389 = vmatprep.subr.mxu0 0.0
  %390 = vmatpush1.msra.mxu0 0.0
  %391 = vmatprep.subr.mxu0 0.0
  %392 = vmatpush1.msra.mxu0 0.0
  %393 = vmatprep.subr.mxu0 0.0
  %394 = vmatpush1.msra.mxu0 0.0
  %395 = vmatprep.subr.mxu0 0.0
  %396 = vmatpush1.msra.mxu0 0.0
  %397 = vmatprep.subr.mxu0 0.0
  %398 = vmatpush1.msra.mxu0 0.0
  %399 = vmatprep.subr.mxu0 0.0
  %400 = vmatpush1.msra.mxu0 0.0
  %401 = vmatprep.subr.mxu0 0.0
  %402 = vmatpush1.msra.mxu0 0.0
  %403 = vmatprep.subr.mxu0 0.0
  %404 = vmatpush1.msra.mxu0 0.0
  %405 = vmatprep.subr.mxu0 0.0
  %406 = vmatpush1.msra.mxu0 0.0
  %407 = vmatprep.subr.mxu0 0.0
  %408 = vmatpush1.msra.mxu0 0.0
  %409 = vmatprep.subr.mxu0 0.0
  %410 = vmatpush1.msra.mxu0 0.0
  %411 = vmatprep.subr.mxu0 0.0
  %412 = vmatpush1.msra.mxu0 0.0
  %413 = vmatprep.subr.mxu0 0.0
  %414 = vmatpush1.msra.mxu0 0.0
  %415 = vmatprep.mubr.f32.mxu0 0.0
  %416 = vmatmul.mubr.f32.gmra.mrb[0].mxu0 %v344
  %v417 = vpop.f32.mrb[0].mxu0
  %v418 = vadd.f32 %v349, %v417
  %v419 = vpop.f32.mrb[0].mxu0
  %420 = vdwg.mxu0
  %vm421 = vcmp.gt.f32.partialorder %v418, 20.0
  %v422 = vmin.f32 %v418, 20.0
  %v423 = vmul.f32 %v422, 1.442695
  %v424 = vpow.pop %v423
  %v425 = vadd.f32 %v424, 1.0
  %v426 = vlog2.pop %v425
  %v427 = vmul.f32 %v426, 0.6931472
  %v428 = vmul.f32 -0.5, %v424
  %v429 = vadd.f32 %v428, 1.0
  %v430 = vmul.f32 %v429, %v424
  %v431 = vand.u32 2147483647, %v424
  %vm432 = vcmp.lt.f32.partialorder %v431, 0.0004427343
  %v433 = vsel %vm432, %v430, %v427
  %v434 = vsel %vm421, %v418, %v433
  %v436 = vrot.slane %v21, 7
  %v438 = vmul.f32 %v434, %v436
  %v440 = vrot.slane %v438, 2
  %v442 = vadd.f32 %v418, %v440
  %v443 = vtanh.pop %v442
  %v444 = vmul.f32 %v21, %v21
  %v445 = vmul.f32 %v444, -0.5
  %v446 = vsub.f32 %v445, 0.9189385
  %v447 = vmul.f32 %v443, %v443
  %v448 = vsub.f32 1.0, %v447
  %v449 = vadd.f32 %v448, 1e-07
  %v451 = vrot.slane %v449, 6
  %v453 = vmul.f32 %v434, %v451
  %v454 = vlog2.pop %v453
  %v455 = vmul.f32 %v454, 0.6931472
  %v457 = vrot.slane %v455, 1
  %v459 = vsub.f32 %v446, %v457
  %460 = vst [vmem:[%s5] sm:$0x3] %v443
  %461 = vst [vmem:[%s5 + $0x1] sm:$0x6] %v459
  // Predicated region
  $region22: #{policy_forward.1} parent=0 // pred_check
    _
  $region23: #{policy_forward.1} parent=0 // pred_check_branch
    %463 = sbr.rel (0) target = $region25
  $region24: #{policy_forward.1} parent=0 // pred_region
    _
  $region25: #{policy_forward.1} parent=0 // pred_fallthru
    _
  // Predicated region
  $region26: #{policy_forward.1} parent=0 // pred_check
    _
  $region27: #{policy_forward.1} parent=0 // pred_check_branch
    %465 = sbr.rel (0) target = $region29
  $region28: #{policy_forward.1} parent=0 // pred_region
    _
  $region29: #{policy_forward.1} parent=0 // pred_fallthru
    _

</llo_original>
